<compile_context>
chip_gen: v7x
topology: tpu7x:2x2x1
jax: 0.10.0
libtpu: 0.0.40
codegen_flags: <defaults>
</compile_context>

<pallas_src>
import functools

import jax
import jax.numpy as jnp
import numpy as np
from jax.experimental import pallas as pl
from jax.experimental.pallas import tpu as pltpu


def _round_up(x, m):
    return ((x + m - 1) // m) * m


def _chamfer_kernel(src_ref, tgt_t_ref, out_ref, row_min_ref, col_min_ref, *,
                    n_true, m_true, tn, tm):
    """Grid = (batch, N-tiles, M-tiles); M-tiles innermost."""
    ni = pl.program_id(1)                 # N-tile index
    mj = pl.program_id(2)                 # M-tile index
    ni_last = pl.num_programs(1) - 1
    mj_last = pl.num_programs(2) - 1

    inf = jnp.float32(jnp.inf)

    # ---- per-batch init (first inner step of each batch) --------------------
    @pl.when(jnp.logical_and(ni == 0, mj == 0))
    def _():
        out_ref[...] = jnp.zeros_like(out_ref)
        col_min_ref[...] = jnp.full(col_min_ref.shape, inf, jnp.float32)

    # ---- per-N-tile init of the running row-min slab -------------------------
    @pl.when(mj == 0)
    def _():
        row_min_ref[...] = jnp.full((tn, tm), inf, jnp.float32)

    src = src_ref[...]                                      # (TN, 3)  f32
    tgt_t = tgt_t_ref[...]                                  # (3, TM)  f32 (lane-dense)

    # Squared norms (tiny reductions) + cross term on the MXU.
    s_sq = jnp.sum(src * src, axis=1, keepdims=True)        # (TN, 1)
    t_sq = jnp.sum(tgt_t * tgt_t, axis=0, keepdims=True)    # (1, TM)
    cross = jnp.dot(src * jnp.float32(-2.0), tgt_t,
                    preferred_element_type=jnp.float32)     # (TN, TM)
    d = jnp.maximum(cross + s_sq + t_sq, 0.0)               # clamp cancellation

    # Validity masks for padded rows / columns.
    col_ids = jax.lax.broadcasted_iota(jnp.int32, (1, tm), 1) + mj * tm
    col_valid = col_ids < m_true                              # (1, TM)
    row_ids = jax.lax.broadcasted_iota(jnp.int32, (tn, 1), 0) + ni * tn
    row_valid = row_ids < n_true                              # (TN, 1)

    # src -> tgt (cham_x): elementwise running min across M tiles (VPU only).
    row_min_ref[...] = jnp.minimum(row_min_ref[...], jnp.where(col_valid, d, inf))

    # tgt -> src (cham_y): per-tile column min folded into a running min.
    c_tile = jnp.min(jnp.where(row_valid, d, inf), axis=0, keepdims=True)  # (1, TM)
    col_min_ref[mj] = jnp.minimum(col_min_ref[mj], c_tile)

    # Finalize this N tile's contribution to cham_x after the last M tile.
    @pl.when(mj == mj_last)
    def _():
        rmin = jnp.min(row_min_ref[...], axis=1, keepdims=True)   # (TN, 1)
        rmin = jnp.where(row_valid, rmin, 0.0)                    # drop padded rows
        out_ref[...] += jnp.sum(rmin) * jnp.float32(1.0 / n_true)

    # Finalize cham_y at the very last step of this batch.
    @pl.when(jnp.logical_and(ni == ni_last, mj == mj_last))
    def _():
        cm = col_min_ref[...]                                     # (M_tiles, 1, TM)
        tile_ids = jax.lax.broadcasted_iota(jnp.int32, cm.shape, 0)
        lane_ids = jax.lax.broadcasted_iota(jnp.int32, cm.shape, 2)
        valid = (tile_ids * tm + lane_ids) < m_true               # drop padded cols
        cm = jnp.where(valid, cm, 0.0)
        out_ref[...] += jnp.sum(cm) * jnp.float32(1.0 / m_true)


def custom_alignment_loss(transformed_source, transformed_target,
                          transformation_weight=0.01, *,
                          tile_n=256, tile_m=512):
    """Pallas implementation of CustomAlignmentLoss.forward (returns the scalar loss)."""
    src = jnp.asarray(transformed_source, jnp.float32)
    tgt = jnp.asarray(transformed_target, jnp.float32)
    B, N, D = src.shape
    Bt, M, Dt = tgt.shape
    assert B == Bt and D == 3 and Dt == 3

    # Tile sizes (capped at the padded problem size for small inputs); tiles chosen
    # with the v7x 64 MiB VMEM ceiling in mind (row-min slab + d temp ~ 1 MiB).
    tn = min(tile_n, _round_up(N, 8))
    tm = min(tile_m, _round_up(M, 128))
    n_pad = _round_up(N, tn)
    m_pad = _round_up(M, tm)
    n_tiles = n_pad // tn
    m_tiles = m_pad // tm

    src_p = jnp.pad(src, ((0, 0), (0, n_pad - N), (0, 0)))
    # Lane-dense target: (B, 3, M_pad) so each xyz coordinate is a full row of lanes.
    tgt_t = jnp.transpose(jnp.pad(tgt, ((0, 0), (0, m_pad - M), (0, 0))), (0, 2, 1))

    kernel = functools.partial(_chamfer_kernel, n_true=N, m_true=M, tn=tn, tm=tm)

    out = pl.pallas_call(
        kernel,
        out_shape=jax.ShapeDtypeStruct((B, 1, 128), jnp.float32),
        grid_spec=pltpu.PrefetchScalarGridSpec(
            num_scalar_prefetch=0,
            grid=(B, n_tiles, m_tiles),
            in_specs=[
                pl.BlockSpec((None, tn, 3), lambda b, i, j: (b, i, 0)),
                pl.BlockSpec((None, 3, tm), lambda b, i, j: (b, 0, j)),
            ],
            out_specs=pl.BlockSpec((None, 1, 128), lambda b, i, j: (b, 0, 0)),
            scratch_shapes=[
                pltpu.VMEM((tn, tm), jnp.float32),          # running row-min slab
                pltpu.VMEM((m_tiles, 1, tm), jnp.float32),  # running column-min
            ],
        ),
        compiler_params=pltpu.CompilerParams(
            dimension_semantics=("parallel", "arbitrary", "arbitrary"),
            vmem_limit_bytes=32 * 1024 * 1024,
        ),
    )(src_p, tgt_t)

    per_batch = out[:, 0, 0]                     # cham_x + cham_y per batch
    return jnp.float32(transformation_weight) * jnp.mean(per_batch)


def _reference_chamfer(src, tgt, weight):
    """Pure-JAX reference for validation."""
    d = jnp.sum((src[:, :, None, :] - tgt[:, None, :, :]) ** 2, axis=-1)  # (B,N,M)
    cham_x = jnp.mean(jnp.min(d, axis=2), axis=1)                          # (B,)
    cham_y = jnp.mean(jnp.min(d, axis=1), axis=1)                          # (B,)
    return weight * jnp.mean(cham_x + cham_y)


if __name__ == "__main__":
    key = jax.random.PRNGKey(0)
    k1, k2, k3, k4 = jax.random.split(key, 4)

    # Small shapes consistent with the module: (B, num_points, 3) point clouds.
    B, N, M = 2, 64, 48
    transformed_source = jax.random.normal(k1, (B, N, 3), dtype=jnp.float32)
    transformed_target = jax.random.normal(k2, (B, M, 3), dtype=jnp.float32)

    loss = jax.block_until_ready(
        custom_alignment_loss(transformed_source, transformed_target, 0.01))
    ref = _reference_chamfer(transformed_source, transformed_target, 0.01)
    np.testing.assert_allclose(np.asarray(loss), np.asarray(ref), rtol=1e-4, atol=1e-6)

    # Multi-tile path (exercises padding masks + online min accumulators).
    B2, N2, M2 = 2, 100, 200
    src2 = jax.random.normal(k3, (B2, N2, 3), dtype=jnp.float32)
    tgt2 = jax.random.normal(k4, (B2, M2, 3), dtype=jnp.float32)
    loss2 = jax.block_until_ready(
        custom_alignment_loss(src2, tgt2, 0.01, tile_n=64, tile_m=128))
    ref2 = _reference_chamfer(src2, tgt2, 0.01)
    np.testing.assert_allclose(np.asarray(loss2), np.asarray(ref2), rtol=1e-4, atol=1e-6)

    # Mirrors the PyTorch module's print of the weighted loss.
    print(f"Transformation loss: {float(loss)}")
    print("KERNEL_OK")
</pallas_src>

<mosaic_0001>
module attributes {stable_mosaic.version = 11 : i64} {
  func.func @_chamfer_kernel(%arg0: i32, %arg1: i32, %arg2: i32, %arg3: memref<1x64x3xf32, #tpu.memory_space<vmem>>, %arg4: memref<1x3x128xf32, #tpu.memory_space<vmem>>, %arg5: memref<1x1x128xf32, #tpu.memory_space<vmem>>, %arg6: memref<64x128xf32, #tpu.memory_space<vmem>>, %arg7: memref<1x1x128xf32, #tpu.memory_space<vmem>>) attributes {dimension_semantics = [#tpu.dimension_semantics<parallel>, #tpu.dimension_semantics<arbitrary>, #tpu.dimension_semantics<arbitrary>], iteration_bounds = array<i64: 2, 1, 1>, scalar_prefetch = 0 : i64, scratch_operands = 2 : i64, tpu.core_type = #tpu.core_type<tc>, window_params = [{transform_indices = @transform_0, window_bounds = array<i64: 1, 64, 3>}, {transform_indices = @transform_1, window_bounds = array<i64: 1, 3, 128>}, {transform_indices = @transform_2, window_bounds = array<i64: 1, 1, 128>}]} {
    %c0_i32 = arith.constant 0 : i32
    %0 = arith.cmpi eq, %arg1, %c0_i32 : i32
    %c0_i32_0 = arith.constant 0 : i32
    %1 = arith.cmpi eq, %arg2, %c0_i32_0 : i32
    %2 = arith.andi %0, %1 : i1
    %3 = arith.extui %2 : i1 to i32
    %cst = arith.constant 0x7F800000 : f32
    %c0_i32_1 = arith.constant 0 : i32
    %4 = arith.cmpi ne, %3, %c0_i32_1 : i32
    scf.if %4 {
      %cst_32 = arith.constant 0.000000e+00 : f32
      %68 = vector.broadcast %cst_32 : f32 to vector<1x128xf32>
      %c0_33 = arith.constant 0 : index
      %c0_34 = arith.constant 0 : index
      %c0_35 = arith.constant 0 : index
      %69 = vector.load %arg5[%c0_33, %c0_34, %c0_35] : memref<1x1x128xf32, #tpu.memory_space<vmem>>, vector<1x1x128xf32>
      %70 = vector.shape_cast %69 : vector<1x1x128xf32> to vector<1x128xf32>
      %71 = vector.shape_cast %68 : vector<1x128xf32> to vector<1x1x128xf32>
      tpu.vector_store %arg5[%c0_33, %c0_34, %c0_35], %71 {strides = array<i32>} : memref<1x1x128xf32, #tpu.memory_space<vmem>>, vector<1x1x128xf32>,
      %72 = vector.broadcast %cst : f32 to vector<1x1x128xf32>
      %c0_36 = arith.constant 0 : index
      %c0_37 = arith.constant 0 : index
      %c0_38 = arith.constant 0 : index
      %73 = vector.load %arg7[%c0_36, %c0_37, %c0_38] : memref<1x1x128xf32, #tpu.memory_space<vmem>>, vector<1x1x128xf32>
      tpu.vector_store %arg7[%c0_36, %c0_37, %c0_38], %72 {strides = array<i32>} : memref<1x1x128xf32, #tpu.memory_space<vmem>>, vector<1x1x128xf32>,
    } else {
    }
    %c0_i32_2 = arith.constant 0 : i32
    %5 = arith.cmpi eq, %arg2, %c0_i32_2 : i32
    %6 = arith.extui %5 : i1 to i32
    %cst_3 = arith.constant 0x7F800000 : f32
    %c0_i32_4 = arith.constant 0 : i32
    %7 = arith.cmpi ne, %6, %c0_i32_4 : i32
    scf.if %7 {
      %68 = vector.broadcast %cst_3 : f32 to vector<64x128xf32>
      %c0_32 = arith.constant 0 : index
      %c0_33 = arith.constant 0 : index
      %69 = vector.load %arg6[%c0_32, %c0_33] : memref<64x128xf32, #tpu.memory_space<vmem>>, vector<64x128xf32>
      tpu.vector_store %arg6[%c0_32, %c0_33], %68 {strides = array<i32>} : memref<64x128xf32, #tpu.memory_space<vmem>>, vector<64x128xf32>,
    } else {
    }
    %c0 = arith.constant 0 : index
    %c0_5 = arith.constant 0 : index
    %c0_6 = arith.constant 0 : index
    %8 = vector.load %arg3[%c0, %c0_5, %c0_6] : memref<1x64x3xf32, #tpu.memory_space<vmem>>, vector<1x64x3xf32>
    %9 = vector.shape_cast %8 : vector<1x64x3xf32> to vector<64x3xf32>
    %c0_7 = arith.constant 0 : index
    %c0_8 = arith.constant 0 : index
    %c0_9 = arith.constant 0 : index
    %10 = vector.load %arg4[%c0_7, %c0_8, %c0_9] : memref<1x3x128xf32, #tpu.memory_space<vmem>>, vector<1x3x128xf32>
    %11 = vector.shape_cast %10 : vector<1x3x128xf32> to vector<3x128xf32>
    %12 = arith.mulf %9, %9 : vector<64x3xf32>
    %cst_10 = arith.constant dense<0.000000e+00> : vector<64xf32>
    %13 = vector.multi_reduction <add>, %12, %cst_10 [1] : vector<64x3xf32> to vector<64xf32>
    %14 = vector.shape_cast %13 : vector<64xf32> to vector<64x1xf32>
    %15 = arith.mulf %11, %11 : vector<3x128xf32>
    %cst_11 = arith.constant dense<0.000000e+00> : vector<128xf32>
    %16 = vector.multi_reduction <add>, %15, %cst_11 [0] : vector<3x128xf32> to vector<128xf32>
    %17 = vector.shape_cast %16 : vector<128xf32> to vector<1x128xf32>
    %cst_12 = arith.constant -2.000000e+00 : f32
    %18 = vector.broadcast %cst_12 : f32 to vector<64x3xf32>
    %19 = arith.mulf %9, %18 : vector<64x3xf32>
    %cst_13 = arith.constant dense<0.000000e+00> : vector<64x128xf32>
    %20 = tpu.matmul %19, %11, %cst_13 {dimension_numbers = #tpu.dot_dimension_numbers<[1], [0], [0], [1], [0, 0, 1, 1], [], []>} : vector<64x3xf32>, vector<3x128xf32>, vector<64x128xf32> -> vector<64x128xf32>
    %21 = vector.broadcast %14 : vector<64x1xf32> to vector<64x128xf32>
    %22 = arith.addf %20, %21 : vector<64x128xf32>
    %23 = vector.broadcast %17 : vector<1x128xf32> to vector<64x128xf32>
    %24 = arith.addf %22, %23 : vector<64x128xf32>
    %cst_14 = arith.constant 0.000000e+00 : f32
    %25 = vector.broadcast %cst_14 : f32 to vector<64x128xf32>
    %26 = arith.maximumf %24, %25 : vector<64x128xf32>
    %27 = tpu.iota {dimensions = array<i32: 1>} : vector<1x128xi32>
    %c128_i32 = arith.constant 128 : i32
    %28 = arith.muli %arg2, %c128_i32 : i32
    %29 = vector.broadcast %28 : i32 to vector<1x128xi32>
    %30 = arith.addi %27, %29 : vector<1x128xi32>
    %c48_i32 = arith.constant 48 : i32
    %31 = vector.broadcast %c48_i32 : i32 to vector<1x128xi32>
    %32 = arith.cmpi slt, %30, %31 : vector<1x128xi32>
    %33 = tpu.iota {dimensions = array<i32: 0>} : vector<64x1xi32>
    %c64_i32 = arith.constant 64 : i32
    %34 = arith.muli %arg1, %c64_i32 : i32
    %35 = vector.broadcast %34 : i32 to vector<64x1xi32>
    %36 = arith.addi %33, %35 : vector<64x1xi32>
    %c64_i32_15 = arith.constant 64 : i32
    %37 = vector.broadcast %c64_i32_15 : i32 to vector<64x1xi32>
    %38 = arith.cmpi slt, %36, %37 : vector<64x1xi32>
    %c0_16 = arith.constant 0 : index
    %c0_17 = arith.constant 0 : index
    %39 = vector.load %arg6[%c0_16, %c0_17] : memref<64x128xf32, #tpu.memory_space<vmem>>, vector<64x128xf32>
    %cst_18 = arith.constant 0x7F800000 : f32
    %40 = vector.shape_cast %32 : vector<1x128xi1> to vector<1x128xi1>
    %41 = vector.broadcast %40 : vector<1x128xi1> to vector<64x128xi1>
    %42 = vector.broadcast %cst_18 : f32 to vector<64x128xf32>
    %43 = arith.select %41, %26, %42 : vector<64x128xi1>, vector<64x128xf32>
    %44 = arith.minimumf %39, %43 : vector<64x128xf32>
    %c0_19 = arith.constant 0 : index
    %c0_20 = arith.constant 0 : index
    %45 = vector.load %arg6[%c0_19, %c0_20] : memref<64x128xf32, #tpu.memory_space<vmem>>, vector<64x128xf32>
    tpu.vector_store %arg6[%c0_19, %c0_20], %44 {strides = array<i32>} : memref<64x128xf32, #tpu.memory_space<vmem>>, vector<64x128xf32>,
    %cst_21 = arith.constant 0x7F800000 : f32
    %46 = vector.shape_cast %38 : vector<64x1xi1> to vector<64x1xi1>
    %47 = vector.broadcast %46 : vector<64x1xi1> to vector<64x128xi1>
    %48 = vector.broadcast %cst_21 : f32 to vector<64x128xf32>
    %49 = arith.select %47, %26, %48 : vector<64x128xi1>, vector<64x128xf32>
    %cst_22 = arith.constant dense<0x7F800000> : vector<128xf32>
    %50 = vector.multi_reduction <minimumf>, %49, %cst_22 [0] : vector<64x128xf32> to vector<128xf32>
    %51 = vector.shape_cast %50 : vector<128xf32> to vector<1x128xf32>
    %52 = arith.index_cast %arg2 : i32 to index
    %c0_23 = arith.constant 0 : index
    %c0_24 = arith.constant 0 : index
    %53 = vector.load %arg7[%52, %c0_23, %c0_24] : memref<1x1x128xf32, #tpu.memory_space<vmem>>, vector<1x1x128xf32>
    %54 = vector.shape_cast %53 : vector<1x1x128xf32> to vector<1x128xf32>
    %55 = arith.minimumf %54, %51 : vector<1x128xf32>
    %56 = arith.index_cast %arg2 : i32 to index
    %c0_25 = arith.constant 0 : index
    %c0_26 = arith.constant 0 : index
    %57 = vector.load %arg7[%56, %c0_25, %c0_26] : memref<1x1x128xf32, #tpu.memory_space<vmem>>, vector<1x1x128xf32>
    %58 = vector.shape_cast %57 : vector<1x1x128xf32> to vector<1x128xf32>
    %59 = vector.shape_cast %55 : vector<1x128xf32> to vector<1x1x128xf32>
    tpu.vector_store %arg7[%56, %c0_25, %c0_26], %59 {strides = array<i32>} : memref<1x1x128xf32, #tpu.memory_space<vmem>>, vector<1x1x128xf32>,
    %c0_i32_27 = arith.constant 0 : i32
    %60 = arith.cmpi eq, %arg2, %c0_i32_27 : i32
    %61 = arith.extui %60 : i1 to i32
    %c0_i32_28 = arith.constant 0 : i32
    %62 = arith.cmpi ne, %61, %c0_i32_28 : i32
    scf.if %62 {
      %c0_32 = arith.constant 0 : index
      %c0_33 = arith.constant 0 : index
      %68 = vector.load %arg6[%c0_32, %c0_33] : memref<64x128xf32, #tpu.memory_space<vmem>>, vector<64x128xf32>
      %cst_34 = arith.constant dense<0x7F800000> : vector<64xf32>
      %69 = vector.multi_reduction <minimumf>, %68, %cst_34 [1] : vector<64x128xf32> to vector<64xf32>
      %70 = vector.shape_cast %69 : vector<64xf32> to vector<64x1xf32>
      %cst_35 = arith.constant 0.000000e+00 : f32
      %71 = vector.broadcast %cst_35 : f32 to vector<64x1xf32>
      %72 = arith.select %38, %70, %71 : vector<64x1xi1>, vector<64x1xf32>
      %c0_36 = arith.constant 0 : index
      %c0_37 = arith.constant 0 : index
      %c0_38 = arith.constant 0 : index
      %73 = vector.load %arg5[%c0_36, %c0_37, %c0_38] : memref<1x1x128xf32, #tpu.memory_space<vmem>>, vector<1x1x128xf32>
      %74 = vector.shape_cast %73 : vector<1x1x128xf32> to vector<1x128xf32>
      %75 = vector.shape_cast %72 : vector<64x1xf32> to vector<1x64x1xf32>
      %cst_39 = arith.constant dense<0.000000e+00> : vector<1xf32>
      %76 = vector.multi_reduction <add>, %75, %cst_39 [1, 2] : vector<1x64x1xf32> to vector<1xf32>
      %77 = vector.shape_cast %76 : vector<1xf32> to vector<1x1x1xf32>
      %78 = vector.extract %77[0, 0, 0] : f32 from vector<1x1x1xf32>
      %cst_40 = arith.constant 1.562500e-02 : f32
      %79 = arith.mulf %78, %cst_40 : f32
      %80 = vector.broadcast %79 : f32 to vector<1x128xf32>
      %81 = arith.addf %74, %80 : vector<1x128xf32>
      %c0_41 = arith.constant 0 : index
      %c0_42 = arith.constant 0 : index
      %c0_43 = arith.constant 0 : index
      %82 = vector.load %arg5[%c0_41, %c0_42, %c0_43] : memref<1x1x128xf32, #tpu.memory_space<vmem>>, vector<1x1x128xf32>
      %83 = vector.shape_cast %82 : vector<1x1x128xf32> to vector<1x128xf32>
      %84 = vector.shape_cast %81 : vector<1x128xf32> to vector<1x1x128xf32>
      tpu.vector_store %arg5[%c0_41, %c0_42, %c0_43], %84 {strides = array<i32>} : memref<1x1x128xf32, #tpu.memory_space<vmem>>, vector<1x1x128xf32>,
    } else {
    }
    %c0_i32_29 = arith.constant 0 : i32
    %63 = arith.cmpi eq, %arg1, %c0_i32_29 : i32
    %c0_i32_30 = arith.constant 0 : i32
    %64 = arith.cmpi eq, %arg2, %c0_i32_30 : i32
    %65 = arith.andi %63, %64 : i1
    %66 = arith.extui %65 : i1 to i32
    %c0_i32_31 = arith.constant 0 : i32
    %67 = arith.cmpi ne, %66, %c0_i32_31 : i32
    scf.if %67 {
      %c0_32 = arith.constant 0 : index
      %c0_33 = arith.constant 0 : index
      %c0_34 = arith.constant 0 : index
      %68 = vector.load %arg7[%c0_32, %c0_33, %c0_34] : memref<1x1x128xf32, #tpu.memory_space<vmem>>, vector<1x1x128xf32>
      %69 = tpu.iota {dimensions = array<i32: 0>} : vector<1x1x128xi32>
      %70 = tpu.iota {dimensions = array<i32: 2>} : vector<1x1x128xi32>
      %c128_i32_35 = arith.constant 128 : i32
      %71 = vector.broadcast %c128_i32_35 : i32 to vector<1x1x128xi32>
      %72 = arith.muli %69, %71 : vector<1x1x128xi32>
      %73 = arith.addi %72, %70 : vector<1x1x128xi32>
      %c48_i32_36 = arith.constant 48 : i32
      %74 = vector.broadcast %c48_i32_36 : i32 to vector<1x1x128xi32>
      %75 = arith.cmpi slt, %73, %74 : vector<1x1x128xi32>
      %cst_37 = arith.constant 0.000000e+00 : f32
      %76 = vector.broadcast %cst_37 : f32 to vector<1x1x128xf32>
      %77 = arith.select %75, %68, %76 : vector<1x1x128xi1>, vector<1x1x128xf32>
      %c0_38 = arith.constant 0 : index
      %c0_39 = arith.constant 0 : index
      %c0_40 = arith.constant 0 : index
      %78 = vector.load %arg5[%c0_38, %c0_39, %c0_40] : memref<1x1x128xf32, #tpu.memory_space<vmem>>, vector<1x1x128xf32>
      %79 = vector.shape_cast %78 : vector<1x1x128xf32> to vector<1x128xf32>
      %80 = vector.shape_cast %77 : vector<1x1x128xf32> to vector<1x1x1x128xf32>
      %cst_41 = arith.constant dense<0.000000e+00> : vector<1xf32>
      %81 = vector.multi_reduction <add>, %80, %cst_41 [1, 2, 3] : vector<1x1x1x128xf32> to vector<1xf32>
      %82 = vector.shape_cast %81 : vector<1xf32> to vector<1x1x1x1xf32>
      %83 = vector.extract %82[0, 0, 0, 0] : f32 from vector<1x1x1x1xf32>
      %cst_42 = arith.constant 0.020833334 : f32
      %84 = arith.mulf %83, %cst_42 : f32
      %85 = vector.broadcast %84 : f32 to vector<1x128xf32>
      %86 = arith.addf %79, %85 : vector<1x128xf32>
      %c0_43 = arith.constant 0 : index
      %c0_44 = arith.constant 0 : index
      %c0_45 = arith.constant 0 : index
      %87 = vector.load %arg5[%c0_43, %c0_44, %c0_45] : memref<1x1x128xf32, #tpu.memory_space<vmem>>, vector<1x1x128xf32>
      %88 = vector.shape_cast %87 : vector<1x1x128xf32> to vector<1x128xf32>
      %89 = vector.shape_cast %86 : vector<1x128xf32> to vector<1x1x128xf32>
      tpu.vector_store %arg5[%c0_43, %c0_44, %c0_45], %89 {strides = array<i32>} : memref<1x1x128xf32, #tpu.memory_space<vmem>>, vector<1x1x128xf32>,
    } else {
    }
    return
  }
  func.func @transform_0(%arg0: i32, %arg1: i32, %arg2: i32) -> (i32, i32, i32) {
    %c0_i32 = arith.constant 0 : i32
    %c0_i32_0 = arith.constant 0 : i32
    return %arg0, %arg1, %c0_i32 : i32, i32, i32
  }
  func.func @transform_1(%arg0: i32, %arg1: i32, %arg2: i32) -> (i32, i32, i32) {
    %c0_i32 = arith.constant 0 : i32
    %c0_i32_0 = arith.constant 0 : i32
    return %arg0, %c0_i32, %arg2 : i32, i32, i32
  }
  func.func @transform_2(%arg0: i32, %arg1: i32, %arg2: i32) -> (i32, i32, i32) {
    %c0_i32 = arith.constant 0 : i32
    %c0_i32_0 = arith.constant 0 : i32
    %c0_i32_1 = arith.constant 0 : i32
    return %arg0, %c0_i32, %c0_i32_0 : i32, i32, i32
  }
}

</mosaic_0001>

<llo_original>
// kernel: tpu_custom_call.1
$region0: #{tpu_custom_call.1}
  #allocation0 [shape = 'u32[]', space=smem, size = 0x4, offset = 0x4, fixed_abs, tag = 'smem constant byte address 0x4 - core index']
  #allocation1 [shape = 'u32[144,128]{1,0:T(1,128)}', space=vmem, size = 0x12000, scoped, tag = 'internal scratch']
  #allocation2 [shape = 'f32[64,128]{1,0:T(8,128)}', space=vmem, size = 0x8000, scoped, tag = 'scratch operand']
  #allocation3 [shape = 'f32[1,1,128]{2,1,0:T(1,128)}', space=vmem, size = 0x200, scoped, tag = 'scratch operand']
  %s0 = inlined_call_operand.vmem [shape: f32[2,64,3], index: 0, kind: input, shape index: {}]
  %s1 = inlined_call_operand.vmem [shape: f32[2,3,128], index: 1, kind: input, shape index: {}]
  %s2 = inlined_call_operand.hbm [shape: f32[2,1,128], index: 2, kind: output, shape index: {}]
  %s3 = sld [smem:[#allocation0]]
  $region57: #{tpu_custom_call.1} parent=0
    _
  %s5 = ssub.s32 1, %s3
  %s6 = scalar_select 0, %s5, %s3
  $region1: #{tpu_custom_call.1} parent=0
    #allocation4 [shape = 'u8[1024]{0}', space=vmem, size = 0x400, scoped, tag = 'output window, operand 0']
    #allocation5 [shape = 's32[2]{0}', space=sflag, size = 0x8, scoped, tag = 'scoped memory for tpu_custom_call.1']
    %7 = vsyncpa [#allocation5], 0
    %s8 = scalar_lea.sflag [#allocation5], 1
    %9 = vsyncpa %s8, 0
    loop: start=0, step=1, limit=4
    $region2: #{tpu_custom_call.1} parent=1 // loop_pre_header
      _
    $region3: #{tpu_custom_call.1} parent=1 // loop_header
      %s11 = sphi 0, %s15
      %p12 = scmp.ge.s32.totalorder %s11, 4
      %s18 = sphi 0, %s37
      %s19 = sphi 0, %s33
      %s20 = sphi 0, %s29
      %s21 = sphi 0, %s18
      %s22 = sphi 0, %s19
      %s23 = sphi 0, %s20
      %s24 = sphi 0, %s21
      %s25 = sphi 0, %s22
      %s26 = sphi 0, %s23
      %s42 = sphi 0, %s44
      %s45 = sphi 0, %s42
      %s46 = sphi 0, %s45
      %s62 = sphi 0, %s46
      %s70 = sphi 0, %s72
      %s73 = sphi 0, %s70
      %s74 = sphi 0, %s73
      %s90 = sphi 0, %s74
      %s96 = sphi 0, %s98
      %s99 = sphi 0, %s96
      %s100 = sphi 0, %s99
      %s116 = sphi 0, %s100
    $region4: #{tpu_custom_call.1} parent=1 // loop_header_branch
      %14 = sbr.rel (%p12) target = $region8
    $region5: #{tpu_custom_call.1} parent=1 // loop_body
      %s16 = ssub.s32 %s11, 1
      %s17 = ssub.s32 %s11, 2
      %s27 = sadd.s32 1, %s20
      %p28 = scmp.ge.s32.totalorder %s27, 1
      %s29 = scalar_select %p28, 0, %s27
      %s30 = sadd.s32 1, %s19
      %s31 = scalar_select %p28, %s30, %s19
      %p32 = scmp.ge.s32.totalorder %s31, 1
      %s33 = scalar_select %p32, 0, %s31
      %s34 = sadd.s32 1, %s18
      %s35 = scalar_select %p32, %s34, %s18
      %p36 = scmp.ge.s32.totalorder %s35, 2
      %s37 = scalar_select %p36, 0, %s35
      %s38 = ssub.s32 %s18, %s37
      %s39 = ssub.s32 %s19, %s33
      %s40 = sor.u32 %s38, %s39
      %p41 = scmp.eq.s32.totalorder %s40, 0
      %s43 = sadd.s32 %s42, 1
      %s44 = scalar_select %p41, %s42, %s43
      %p47 = pneg %p41
      %p48 = scmp.eq.s32.totalorder %s11, 1
      %p49 = por %p47, %p48
      %p50 = scmp.ne.s32.totalorder %s42, %s45
      %p51 = scmp.eq.s32.totalorder %s11, 0
      %p52 = por %p50, %p51
      %p53 = scmp.ne.s32.totalorder %s42, %s45
      %p54 = scmp.eq.s32.totalorder %s16, 1
      %p55 = por %p53, %p54
      %p56 = scmp.ne.s32.totalorder %s45, %s46
      %p57 = scmp.eq.s32.totalorder %s16, 0
      %p58 = por %p56, %p57
      %p59 = scmp.ne.s32.totalorder %s45, %s46
      %p60 = scmp.eq.s32.totalorder %s17, 1
      %p61 = por %p59, %p60
      %p63 = scmp.ne.s32.totalorder %s46, %s62
      %p64 = scmp.eq.s32.totalorder %s17, 0
      %p65 = por %p63, %p64
      %s66 = ssub.s32 %s18, %s37
      %s67 = ssub.s32 %s20, %s29
      %s68 = sor.u32 %s66, %s67
      %p69 = scmp.eq.s32.totalorder %s68, 0
      %s71 = sadd.s32 %s70, 1
      %s72 = scalar_select %p69, %s70, %s71
      %p75 = pneg %p69
      %p76 = scmp.eq.s32.totalorder %s11, 1
      %p77 = por %p75, %p76
      %p78 = scmp.ne.s32.totalorder %s70, %s73
      %p79 = scmp.eq.s32.totalorder %s11, 0
      %p80 = por %p78, %p79
      %p81 = scmp.ne.s32.totalorder %s70, %s73
      %p82 = scmp.eq.s32.totalorder %s16, 1
      %p83 = por %p81, %p82
      %p84 = scmp.ne.s32.totalorder %s73, %s74
      %p85 = scmp.eq.s32.totalorder %s16, 0
      %p86 = por %p84, %p85
      %p87 = scmp.ne.s32.totalorder %s73, %s74
      %p88 = scmp.eq.s32.totalorder %s17, 1
      %p89 = por %p87, %p88
      %p91 = scmp.ne.s32.totalorder %s74, %s90
      %p92 = scmp.eq.s32.totalorder %s17, 0
      %p93 = por %p91, %p92
      %s94 = ssub.s32 %s18, %s37
      %p95 = scmp.eq.s32.totalorder %s94, 0
      %s97 = sadd.s32 %s96, 1
      %s98 = scalar_select %p95, %s96, %s97
      %p101 = pneg %p95
      %p102 = scmp.eq.s32.totalorder %s11, 1
      %p103 = por %p101, %p102
      %p104 = scmp.ne.s32.totalorder %s96, %s99
      %p105 = scmp.eq.s32.totalorder %s11, 0
      %p106 = por %p104, %p105
      %p107 = scmp.ne.s32.totalorder %s96, %s99
      %p108 = scmp.eq.s32.totalorder %s16, 1
      %p109 = por %p107, %p108
      %p110 = scmp.ne.s32.totalorder %s99, %s100
      %p111 = scmp.eq.s32.totalorder %s16, 0
      %p112 = por %p110, %p111
      %p113 = scmp.ne.s32.totalorder %s99, %s100
      %p114 = scmp.eq.s32.totalorder %s17, 1
      %p115 = por %p113, %p114
      %p117 = scmp.ne.s32.totalorder %s100, %s116
      %p118 = scmp.eq.s32.totalorder %s17, 0
      %p119 = por %p117, %p118
      %p120 = scmp.le.s32.totalorder 1, %s11
      %p121 = scmp.lt.s32.totalorder %s11, 3
      %p122 = pnand %p120, %p121
      %p123 = pneg %p122
      // Predicated region
      $region9: #{tpu_custom_call.1} parent=5 // pred_check
        _
      $region10: #{tpu_custom_call.1} parent=5 // pred_check_branch
        %125 = sbr.rel (%p122) target = $region12
      $region11: #{tpu_custom_call.1} parent=5 // pred_region
        %s126 = ssub.s32 %s11, 1
      $region12: #{tpu_custom_call.1} parent=5 // pred_fallthru
        _
      %p127 = scmp.lt.s32.totalorder %s11, 2
      // Predicated region
      $region13: #{tpu_custom_call.1} parent=5 // pred_check
        %p128 = pneg %p127
      $region14: #{tpu_custom_call.1} parent=5 // pred_check_branch
        %130 = sbr.rel (%p128) target = $region16
      $region15: #{tpu_custom_call.1} parent=5 // pred_region
        // Predicated region
        $region17: #{tpu_custom_call.1} parent=15 // pred_check
          %p131 = pneg %p52
        $region18: #{tpu_custom_call.1} parent=15 // pred_check_branch
          %133 = sbr.rel (%p131) target = $region20
        $region19: #{tpu_custom_call.1} parent=15 // pred_region
          %s134 = smul.u32 8, %s19
          %p135 = scmp.lt.s32.totalorder %s18, 1
          %s136 = scalar_select %p135, %s18, 1
          %p137 = scmp.lt.s32.totalorder %s134, 7
          %s138 = scalar_select %p137, %s134, 7
          %s139 = smul.addr %s136, 8
          %s140 = sadd.s32 %s138, %s139
          %s141 = smul.addr %s140, 8
          %s142 = scalar_lea.vmem %s0, %s141
          %s143 = smul.u32 8, %s19
        $region20: #{tpu_custom_call.1} parent=15 // pred_fallthru
          _
        // Predicated region
        $region21: #{tpu_custom_call.1} parent=15 // pred_check
          %p144 = pneg %p80
        $region22: #{tpu_custom_call.1} parent=15 // pred_check_branch
          %146 = sbr.rel (%p144) target = $region24
        $region23: #{tpu_custom_call.1} parent=15 // pred_region
          %p147 = scmp.lt.s32.totalorder %s18, 1
          %s148 = scalar_select %p147, %s18, 1
          %p149 = scmp.lt.s32.totalorder %s20, 0
          %s150 = scalar_select %p149, %s20, 0
          %s151 = sadd.s32 %s150, %s148
          %s152 = smul.addr %s151, 4
          %s153 = scalar_lea.vmem %s1, %s152
        $region24: #{tpu_custom_call.1} parent=15 // pred_fallthru
          _
      $region16: #{tpu_custom_call.1} parent=5 // pred_fallthru
        _
      %p154 = scmp.le.s32.totalorder 1, %s11
      %p155 = scmp.lt.s32.totalorder %s11, 3
      %p156 = pnand %p154, %p155
      %p157 = pneg %p156
      // Predicated region
      $region25: #{tpu_custom_call.1} parent=5 // pred_check
        _
      $region26: #{tpu_custom_call.1} parent=5 // pred_check_branch
        %159 = sbr.rel (%p156) target = $region28
      $region27: #{tpu_custom_call.1} parent=5 // pred_region
        %s160 = ssub.s32 %s11, 1
        %s161 = smul.u32 8, %s22
        %p162 = scmp.lt.s32.totalorder %s21, 1
        %s163 = scalar_select %p162, %s21, 1
        %p164 = scmp.lt.s32.totalorder %s161, 7
        %s165 = scalar_select %p164, %s161, 7
        %s166 = smul.addr %s163, 8
        %s167 = sadd.s32 %s165, %s166
        %s168 = smul.addr %s167, 8
        %s169 = scalar_lea.vmem %s0, %s168
        %p170 = pneg %p58
        %p171 = pneg %p55
        %p172 = scmp.lt.s32.totalorder %s21, 1
        %s173 = scalar_select %p172, %s21, 1
        %p174 = scmp.lt.s32.totalorder %s23, 0
        %s175 = scalar_select %p174, %s23, 0
        %s176 = sadd.s32 %s175, %s173
        %s177 = smul.addr %s176, 4
        %s178 = scalar_lea.vmem %s1, %s177
        %p179 = pneg %p86
        %p180 = pneg %p83
        %p181 = pneg %p112
        %p182 = pneg %p109
        %s183 = sand.u32 %s99, 1
        %s184 = scalar_lea.sflag [#allocation5], %s183
        %s185 = sand.u32 %s99, 1
        %s186 = scalar_lea.vmem [#allocation4], %s185
        %s187 = smul.u32 8, %s22
        %p188 = scmp.lt.s32.totalorder %s21, 1
        %s189 = scalar_select %p188, %s21, 1
        %p190 = scmp.lt.s32.totalorder %s187, 7
        %s191 = scalar_select %p190, %s187, 7
        %s192 = smul.addr %s189, 8
        %s193 = sadd.s32 %s191, %s192
        %s194 = smul.addr %s193, 8
        %s195 = scalar_lea.vmem %s0, %s194
        %s196 = smul.u32 8, %s22
        %p197 = scmp.lt.s32.totalorder %s21, 1
        %s198 = scalar_select %p197, %s21, 1
        %p199 = scmp.lt.s32.totalorder %s23, 0
        %s200 = scalar_select %p199, %s23, 0
        %s201 = sadd.s32 %s200, %s198
        %s202 = smul.addr %s201, 4
        %s203 = scalar_lea.vmem %s1, %s202
        %p204 = scmp.eq.s32.totalorder %s22, 0
        %p205 = scmp.eq.s32.totalorder %s23, 0
        %p206 = pnand %p204, %p205
        %p207 = pneg %p206
        // Predicated region
        $region29: #{tpu_custom_call.1} parent=27 // pred_check
          _
        $region30: #{tpu_custom_call.1} parent=27 // pred_check_branch
          %209 = sbr.rel (%p206) target = $region32
        $region31: #{tpu_custom_call.1} parent=27 // pred_region
          %210 = vst [vmem:[%s186] sm:$0x1] 0.0
          %211 = vst [vmem:[#allocation3] sm:$0x1] inf
        $region32: #{tpu_custom_call.1} parent=27 // pred_fallthru
          _
        // Predicated region
        $region33: #{tpu_custom_call.1} parent=27 // pred_check
          %p212 = pneg %p205
        $region34: #{tpu_custom_call.1} parent=27 // pred_check_branch
          %214 = sbr.rel (%p212) target = $region36
        $region35: #{tpu_custom_call.1} parent=27 // pred_region
          %215 = vst [vmem:[#allocation2] sm:$0xff] inf
          %216 = vst [vmem:[#allocation2 + $0x8] sm:$0xff] inf
          %217 = vst [vmem:[#allocation2 + $0x10] sm:$0xff] inf
          %218 = vst [vmem:[#allocation2 + $0x18] sm:$0xff] inf
          %219 = vst [vmem:[#allocation2 + $0x20] sm:$0xff] inf
          %220 = vst [vmem:[#allocation2 + $0x28] sm:$0xff] inf
          %221 = vst [vmem:[#allocation2 + $0x30] sm:$0xff] inf
          %222 = vst [vmem:[#allocation2 + $0x38] sm:$0xff] inf
        $region36: #{tpu_custom_call.1} parent=27 // pred_fallthru
          _
        %v223 = vld [vmem:[%s195] sm:$0xff]
        %v224 = vld [vmem:[%s195 + $0x8] sm:$0xff]
        %v225 = vld [vmem:[%s195 + $0x10] sm:$0xff]
        %v226 = vld [vmem:[%s195 + $0x18] sm:$0xff]
        %v227 = vld [vmem:[%s195 + $0x20] sm:$0xff]
        %v228 = vld [vmem:[%s195 + $0x28] sm:$0xff]
        %v229 = vld [vmem:[%s195 + $0x30] sm:$0xff]
        %v230 = vld [vmem:[%s195 + $0x38] sm:$0xff]
        %v231 = vld [vmem:[%s203] sm:$0x7]
        %v232 = vmul.f32 %v223, %v223
        %v233 = vmul.f32 %v224, %v224
        %v234 = vmul.f32 %v225, %v225
        %v235 = vmul.f32 %v226, %v226
        %v236 = vmul.f32 %v227, %v227
        %v237 = vmul.f32 %v228, %v228
        %v238 = vmul.f32 %v229, %v229
        %v239 = vmul.f32 %v230, %v230
        %vm240 = vcmask 23552
        %v241 = vsel %vm240, %v232, 0.0
        %242 = vadd.xlane.f32.xlu0 %v241
        %v243 = vpop.xlane.xlu0 %242
        %v244 = vsel %vm240, %v233, 0.0
        %245 = vadd.xlane.f32.xlu0 %v244
        %v246 = vpop.xlane.xlu0 %245
        %v247 = vsel %vm240, %v234, 0.0
        %248 = vadd.xlane.f32.xlu0 %v247
        %v249 = vpop.xlane.xlu0 %248
        %v250 = vsel %vm240, %v235, 0.0
        %251 = vadd.xlane.f32.xlu0 %v250
        %v252 = vpop.xlane.xlu0 %251
        %v253 = vsel %vm240, %v236, 0.0
        %254 = vadd.xlane.f32.xlu0 %v253
        %v255 = vpop.xlane.xlu0 %254
        %v256 = vsel %vm240, %v237, 0.0
        %257 = vadd.xlane.f32.xlu0 %v256
        %v258 = vpop.xlane.xlu0 %257
        %v259 = vsel %vm240, %v238, 0.0
        %260 = vadd.xlane.f32.xlu0 %v259
        %v261 = vpop.xlane.xlu0 %260
        %v262 = vsel %vm240, %v239, 0.0
        %263 = vadd.xlane.f32.xlu0 %v262
        %v264 = vpop.xlane.xlu0 %263
        %v265 = vmul.f32 %v231, %v231
        %vm266 = vcmask 1042432
        %v267 = vsel %vm266, %v265, 0.0
        %v268 = vrot.slane %v267, 4
        %v269 = vadd.f32 %v267, %v268
        %v270 = vrot.slane %v269, 2
        %v271 = vadd.f32 %v269, %v270
        %v272 = vrot.slane %v271, 1
        %v273 = vadd.f32 %v271, %v272
        %v274 = vmul.f32 %v223, -2.0
        %v275 = vmul.f32 %v224, -2.0
        %v276 = vmul.f32 %v225, -2.0
        %v277 = vmul.f32 %v226, -2.0
        %v278 = vmul.f32 %v227, -2.0
        %v279 = vmul.f32 %v228, -2.0
        %v280 = vmul.f32 %v229, -2.0
        %v281 = vmul.f32 %v230, -2.0
        %v283 = vsel %vm240, %v274, 0
        %v286 = vsel %vm240, %v275, 0
        %v289 = vsel %vm240, %v276, 0
        %v292 = vsel %vm240, %v277, 0
        %v295 = vsel %vm240, %v278, 0
        %v298 = vsel %vm240, %v279, 0
        %v301 = vsel %vm240, %v280, 0
        %v304 = vsel %vm240, %v281, 0
        %v307 = vsel %vm266, %v231, 0
        %309 = vmatprep.subr.mxu0 0.0
        %310 = vmatpush1.msra.mxu0 %v307
        %311 = vmatprep.subr.mxu0 0.0
        %312 = vmatpush1.msra.mxu0 0.0
        %313 = vmatprep.subr.mxu0 0.0
        %314 = vmatpush1.msra.mxu0 0.0
        %315 = vmatprep.subr.mxu0 0.0
        %316 = vmatpush1.msra.mxu0 0.0
        %317 = vmatprep.subr.mxu0 0.0
        %318 = vmatpush1.msra.mxu0 0.0
        %319 = vmatprep.subr.mxu0 0.0
        %320 = vmatpush1.msra.mxu0 0.0
        %321 = vmatprep.subr.mxu0 0.0
        %322 = vmatpush1.msra.mxu0 0.0
        %323 = vmatprep.subr.mxu0 0.0
        %324 = vmatpush1.msra.mxu0 0.0
        %325 = vmatprep.subr.mxu0 0.0
        %326 = vmatpush1.msra.mxu0 0.0
        %327 = vmatprep.subr.mxu0 0.0
        %328 = vmatpush1.msra.mxu0 0.0
        %329 = vmatprep.subr.mxu0 0.0
        %330 = vmatpush1.msra.mxu0 0.0
        %331 = vmatprep.subr.mxu0 0.0
        %332 = vmatpush1.msra.mxu0 0.0
        %333 = vmatprep.subr.mxu0 0.0
        %334 = vmatpush1.msra.mxu0 0.0
        %335 = vmatprep.subr.mxu0 0.0
        %336 = vmatpush1.msra.mxu0 0.0
        %337 = vmatprep.subr.mxu0 0.0
        %338 = vmatpush1.msra.mxu0 0.0
        %339 = vmatprep.subr.mxu0 0.0
        %340 = vmatpush1.msra.mxu0 0.0
        %341 = vmatprep.subr.mxu0 0.0
        %342 = vmatpush1.msra.mxu0 0.0
        %343 = vmatprep.subr.mxu0 0.0
        %344 = vmatpush1.msra.mxu0 0.0
        %345 = vmatprep.subr.mxu0 0.0
        %346 = vmatpush1.msra.mxu0 0.0
        %347 = vmatprep.subr.mxu0 0.0
        %348 = vmatpush1.msra.mxu0 0.0
        %349 = vmatprep.subr.mxu0 0.0
        %350 = vmatpush1.msra.mxu0 0.0
        %351 = vmatprep.subr.mxu0 0.0
        %352 = vmatpush1.msra.mxu0 0.0
        %353 = vmatprep.subr.mxu0 0.0
        %354 = vmatpush1.msra.mxu0 0.0
        %355 = vmatprep.subr.mxu0 0.0
        %356 = vmatpush1.msra.mxu0 0.0
        %357 = vmatprep.subr.mxu0 0.0
        %358 = vmatpush1.msra.mxu0 0.0
        %359 = vmatprep.subr.mxu0 0.0
        %360 = vmatpush1.msra.mxu0 0.0
        %361 = vmatprep.subr.mxu0 0.0
        %362 = vmatpush1.msra.mxu0 0.0
        %363 = vmatprep.subr.mxu0 0.0
        %364 = vmatpush1.msra.mxu0 0.0
        %365 = vmatprep.subr.mxu0 0.0
        %366 = vmatpush1.msra.mxu0 0.0
        %367 = vmatprep.subr.mxu0 0.0
        %368 = vmatpush1.msra.mxu0 0.0
        %369 = vmatprep.subr.mxu0 0.0
        %370 = vmatpush1.msra.mxu0 0.0
        %371 = vmatprep.subr.mxu0 0.0
        %372 = vmatpush1.msra.mxu0 0.0
        %373 = vmatprep.mubr.f32.mxu0 0.0
        %374 = vmatmul.mubr.f32.gmra.mrb[0].mxu0 %v283
        %v375 = vpop.f32.mrb[0].mxu0
        %v376 = vadd.f32 %v243, %v375
        %v377 = vpop.f32.mrb[0].mxu0
        %378 = vmatprep.mubr.f32.mxu0 0.0
        %379 = vmatmul.mubr.f32.gmra.mrb[0].mxu0 %v286
        %v380 = vpop.f32.mrb[0].mxu0
        %v381 = vadd.f32 %v246, %v380
        %v382 = vpop.f32.mrb[0].mxu0
        %383 = vmatprep.mubr.f32.mxu0 0.0
        %384 = vmatmul.mubr.f32.gmra.mrb[0].mxu0 %v289
        %v385 = vpop.f32.mrb[0].mxu0
        %v386 = vadd.f32 %v249, %v385
        %v387 = vpop.f32.mrb[0].mxu0
        %388 = vmatprep.mubr.f32.mxu0 0.0
        %389 = vmatmul.mubr.f32.gmra.mrb[0].mxu0 %v292
        %v390 = vpop.f32.mrb[0].mxu0
        %v391 = vadd.f32 %v252, %v390
        %v392 = vpop.f32.mrb[0].mxu0
        %393 = vmatprep.mubr.f32.mxu0 0.0
        %394 = vmatmul.mubr.f32.gmra.mrb[0].mxu0 %v295
        %v395 = vpop.f32.mrb[0].mxu0
        %v396 = vadd.f32 %v255, %v395
        %v397 = vpop.f32.mrb[0].mxu0
        %398 = vmatprep.mubr.f32.mxu0 0.0
        %399 = vmatmul.mubr.f32.gmra.mrb[0].mxu0 %v298
        %v400 = vpop.f32.mrb[0].mxu0
        %v401 = vadd.f32 %v258, %v400
        %v402 = vpop.f32.mrb[0].mxu0
        %403 = vmatprep.mubr.f32.mxu0 0.0
        %404 = vmatmul.mubr.f32.gmra.mrb[0].mxu0 %v301
        %v405 = vpop.f32.mrb[0].mxu0
        %v406 = vadd.f32 %v261, %v405
        %v407 = vpop.f32.mrb[0].mxu0
        %408 = vmatprep.mubr.f32.mxu0 0.0
        %409 = vmatmul.mubr.f32.gmra.mrb[0].mxu0 %v304
        %v410 = vpop.f32.mrb[0].mxu0
        %v411 = vadd.f32 %v264, %v410
        %v412 = vpop.f32.mrb[0].mxu0
        %413 = vdwg.mxu0
        %v414 = vadd.f32 %v376, %v273
        %v415 = vadd.f32 %v381, %v273
        %v416 = vadd.f32 %v386, %v273
        %v417 = vadd.f32 %v391, %v273
        %v418 = vadd.f32 %v396, %v273
        %v419 = vadd.f32 %v401, %v273
        %v420 = vadd.f32 %v406, %v273
        %v421 = vadd.f32 %v411, %v273
        %v422 = vmax.f32 %v414, 0.0
        %v423 = vmax.f32 %v415, 0.0
        %v424 = vmax.f32 %v416, 0.0
        %v425 = vmax.f32 %v417, 0.0
        %v426 = vmax.f32 %v418, 0.0
        %v427 = vmax.f32 %v419, 0.0
        %v428 = vmax.f32 %v420, 0.0
        %v429 = vmax.f32 %v421, 0.0
        %v430 = vlaneseq
        %v431 = vand.u32 %v430, 127
        %s432 = smul.u32 %s23, 128
        %v433 = vstv %s432
        %v434 = vadd.s32 %v431, %v433
        %vm435 = vcmp.lt.s32.totalorder %v434, 48
        %v436 = vlaneseq
        %v437 = vshrl.u32 %v436, 7
        %v438 = vadd.s32 %v437, 8
        %v439 = vadd.s32 %v437, 16
        %v440 = vadd.s32 %v437, 24
        %v441 = vadd.s32 %v437, 32
        %v442 = vadd.s32 %v437, 40
        %v443 = vadd.s32 %v437, 48
        %v444 = vadd.s32 %v437, 56
        %s445 = smul.u32 %s22, 64
        %v446 = vstv %s445
        %v447 = vadd.s32 %v437, %v446
        %v448 = vadd.s32 %v438, %v446
        %v449 = vadd.s32 %v439, %v446
        %v450 = vadd.s32 %v440, %v446
        %v451 = vadd.s32 %v441, %v446
        %v452 = vadd.s32 %v442, %v446
        %v453 = vadd.s32 %v443, %v446
        %v454 = vadd.s32 %v444, %v446
        %vm455 = vcmp.lt.s32.totalorder %v447, 64
        %vm456 = vcmp.lt.s32.totalorder %v448, 64
        %vm457 = vcmp.lt.s32.totalorder %v449, 64
        %vm458 = vcmp.lt.s32.totalorder %v450, 64
        %vm459 = vcmp.lt.s32.totalorder %v451, 64
        %vm460 = vcmp.lt.s32.totalorder %v452, 64
        %vm461 = vcmp.lt.s32.totalorder %v453, 64
        %vm462 = vcmp.lt.s32.totalorder %v454, 64
        %v463 = vld [vmem:[#allocation2] sm:$0xff]
        %v464 = vld [vmem:[#allocation2 + $0x8] sm:$0xff]
        %v465 = vld [vmem:[#allocation2 + $0x10] sm:$0xff]
        %v466 = vld [vmem:[#allocation2 + $0x18] sm:$0xff]
        %v467 = vld [vmem:[#allocation2 + $0x20] sm:$0xff]
        %v468 = vld [vmem:[#allocation2 + $0x28] sm:$0xff]
        %v469 = vld [vmem:[#allocation2 + $0x30] sm:$0xff]
        %v470 = vld [vmem:[#allocation2 + $0x38] sm:$0xff]
        %v471 = vsel %vm435, 1, 0
        %vm472 = vcmp.eq.s32.totalorder %v471, 1
        %v473 = vsel %vm472, %v422, inf
        %v474 = vsel %vm472, %v423, inf
        %v475 = vsel %vm472, %v424, inf
        %v476 = vsel %vm472, %v425, inf
        %v477 = vsel %vm472, %v426, inf
        %v478 = vsel %vm472, %v427, inf
        %v479 = vsel %vm472, %v428, inf
        %v480 = vsel %vm472, %v429, inf
        %v481 = vmin.f32 %v463, %v473
        %v482 = vmin.f32 %v464, %v474
        %v483 = vmin.f32 %v465, %v475
        %v484 = vmin.f32 %v466, %v476
        %v485 = vmin.f32 %v467, %v477
        %v486 = vmin.f32 %v468, %v478
        %v487 = vmin.f32 %v469, %v479
        %v488 = vmin.f32 %v470, %v480
        %489 = vst [vmem:[#allocation2] sm:$0xff] %v481
        %490 = vst [vmem:[#allocation2 + $0x8] sm:$0xff] %v482
        %491 = vst [vmem:[#allocation2 + $0x10] sm:$0xff] %v483
        %492 = vst [vmem:[#allocation2 + $0x18] sm:$0xff] %v484
        %493 = vst [vmem:[#allocation2 + $0x20] sm:$0xff] %v485
        %494 = vst [vmem:[#allocation2 + $0x28] sm:$0xff] %v486
        %495 = vst [vmem:[#allocation2 + $0x30] sm:$0xff] %v487
        %496 = vst [vmem:[#allocation2 + $0x38] sm:$0xff] %v488
        %v497 = vsel %vm455, 1, 0
        %v498 = vsel %vm456, 1, 0
        %v499 = vsel %vm457, 1, 0
        %v500 = vsel %vm458, 1, 0
        %v501 = vsel %vm459, 1, 0
        %v502 = vsel %vm460, 1, 0
        %v503 = vsel %vm461, 1, 0
        %v504 = vsel %vm462, 1, 0
        %vm505 = vcmp.eq.s32.totalorder %v497, 1
        %vm506 = vcmp.eq.s32.totalorder %v498, 1
        %vm507 = vcmp.eq.s32.totalorder %v499, 1
        %vm508 = vcmp.eq.s32.totalorder %v500, 1
        %vm509 = vcmp.eq.s32.totalorder %v501, 1
        %vm510 = vcmp.eq.s32.totalorder %v502, 1
        %vm511 = vcmp.eq.s32.totalorder %v503, 1
        %vm512 = vcmp.eq.s32.totalorder %v504, 1
        %v513 = vsel %vm505, %v422, inf
        %v514 = vsel %vm506, %v423, inf
        %v515 = vsel %vm507, %v424, inf
        %v516 = vsel %vm508, %v425, inf
        %v517 = vsel %vm509, %v426, inf
        %v518 = vsel %vm510, %v427, inf
        %v519 = vsel %vm511, %v428, inf
        %v520 = vsel %vm512, %v429, inf
        %v521 = vmin.f32 %v513, %v517
        %v522 = vmin.f32 %v514, %v518
        %v523 = vmin.f32 %v515, %v519
        %v524 = vmin.f32 %v516, %v520
        %v525 = vmin.f32 %v521, %v522
        %v526 = vmin.f32 %v523, %v524
        %v527 = vmin.f32 %v525, %v526
        %v528 = vrot.slane %v527, 4
        %v529 = vmin.f32 %v527, %v528
        %v530 = vrot.slane %v529, 2
        %v531 = vmin.f32 %v529, %v530
        %v532 = vrot.slane %v531, 1
        %v533 = vmin.f32 %v531, %v532
        %s534 = scalar_lea.vmem [#allocation3], %s23
        %v535 = vld [vmem:[%s534] sm:$0x1]
        %v536 = vmin.f32 %v535, %v533
        %537 = vst [vmem:[%s534] sm:$0x1] %v536
        // Predicated region
        $region37: #{tpu_custom_call.1} parent=27 // pred_check
          %p538 = pneg %p205
        $region38: #{tpu_custom_call.1} parent=27 // pred_check_branch
          %540 = sbr.rel (%p538) target = $region40
        $region39: #{tpu_custom_call.1} parent=27 // pred_region
          %v541 = vld [vmem:[#allocation2] sm:$0xff]
          %v542 = vld [vmem:[#allocation2 + $0x8] sm:$0xff]
          %v543 = vld [vmem:[#allocation2 + $0x10] sm:$0xff]
          %v544 = vld [vmem:[#allocation2 + $0x18] sm:$0xff]
          %v545 = vld [vmem:[#allocation2 + $0x20] sm:$0xff]
          %v546 = vld [vmem:[#allocation2 + $0x28] sm:$0xff]
          %v547 = vld [vmem:[#allocation2 + $0x30] sm:$0xff]
          %v548 = vld [vmem:[#allocation2 + $0x38] sm:$0xff]
          %549 = vmin.xlane.f32.xlu0 %v541
          %v550 = vpop.xlane.xlu0 %549
          %551 = vmin.xlane.f32.xlu0 %v542
          %v552 = vpop.xlane.xlu0 %551
          %553 = vmin.xlane.f32.xlu0 %v543
          %v554 = vpop.xlane.xlu0 %553
          %555 = vmin.xlane.f32.xlu0 %v544
          %v556 = vpop.xlane.xlu0 %555
          %557 = vmin.xlane.f32.xlu0 %v545
          %v558 = vpop.xlane.xlu0 %557
          %559 = vmin.xlane.f32.xlu0 %v546
          %v560 = vpop.xlane.xlu0 %559
          %561 = vmin.xlane.f32.xlu0 %v547
          %v562 = vpop.xlane.xlu0 %561
          %563 = vmin.xlane.f32.xlu0 %v548
          %v564 = vpop.xlane.xlu0 %563
          %v565 = vsel %vm455, %v550, 0.0
          %v566 = vsel %vm456, %v552, 0.0
          %v567 = vsel %vm457, %v554, 0.0
          %v568 = vsel %vm458, %v556, 0.0
          %v569 = vsel %vm459, %v558, 0.0
          %v570 = vsel %vm460, %v560, 0.0
          %v571 = vsel %vm461, %v562, 0.0
          %v572 = vsel %vm462, %v564, 0.0
          %v573 = vld [vmem:[%s186] sm:$0x1]
          %vm574 = vcmask 7168
          %v575 = vsel %vm574, %v565, 0.0
          %v576 = vsel %vm574, %v566, 0.0
          %v577 = vadd.f32 %v575, %v576
          %v578 = vsel %vm574, %v567, 0.0
          %v579 = vadd.f32 %v577, %v578
          %v580 = vsel %vm574, %v568, 0.0
          %v581 = vadd.f32 %v579, %v580
          %v582 = vsel %vm574, %v569, 0.0
          %v583 = vadd.f32 %v581, %v582
          %v584 = vsel %vm574, %v570, 0.0
          %v585 = vadd.f32 %v583, %v584
          %v586 = vsel %vm574, %v571, 0.0
          %v587 = vadd.f32 %v585, %v586
          %v588 = vsel %vm574, %v572, 0.0
          %v589 = vadd.f32 %v587, %v588
          %590 = vadd.xlane.f32.xlu0 %v589
          %v591 = vpop.xlane.xlu0 %590
          %v592 = vrot.slane %v591, 4
          %v593 = vadd.f32 %v591, %v592
          %v594 = vrot.slane %v593, 2
          %v595 = vadd.f32 %v593, %v594
          %v596 = vrot.slane %v595, 1
          %v597 = vadd.f32 %v595, %v596
          %s598 = vtos %v597
          %s599 = smul.f32 %s598, 0.015625
          %v600 = vstv %s599
          %v601 = vadd.f32 %v573, %v600
          %602 = vst [vmem:[%s186] sm:$0x1] %v601
        $region40: #{tpu_custom_call.1} parent=27 // pred_fallthru
          _
        // Predicated region
        $region41: #{tpu_custom_call.1} parent=27 // pred_check
          _
        $region42: #{tpu_custom_call.1} parent=27 // pred_check_branch
          %604 = sbr.rel (%p206) target = $region44
        $region43: #{tpu_custom_call.1} parent=27 // pred_region
          %v605 = vld [vmem:[#allocation3] sm:$0x1]
          %vm606 = vcmp.lt.s32.totalorder %v431, 48
          %v607 = vsel %vm606, %v605, 0.0
          %v608 = vld [vmem:[%s186] sm:$0x1]
          %vm609 = vcmask 1040384
          %v610 = vsel %vm609, %v607, 0.0
          %611 = vadd.xlane.f32.xlu0 %v610
          %v612 = vpop.xlane.xlu0 %611
          %v613 = vrot.slane %v612, 4
          %v614 = vadd.f32 %v612, %v613
          %v615 = vrot.slane %v614, 2
          %v616 = vadd.f32 %v614, %v615
          %v617 = vrot.slane %v616, 1
          %v618 = vadd.f32 %v616, %v617
          %s619 = vtos %v618
          %s620 = smul.f32 %s619, 0.020833334
          %v621 = vstv %s620
          %v622 = vadd.f32 %v608, %v621
          %623 = vst [vmem:[%s186] sm:$0x1] %v622
        $region44: #{tpu_custom_call.1} parent=27 // pred_fallthru
          _
        %s624 = sand.u32 %s99, 1
        %s625 = scalar_lea.sflag [#allocation5], %s624
        %s626 = sand.u32 %s99, 1
        %s627 = scalar_lea.vmem [#allocation4], %s626
        // Predicated region
        $region45: #{tpu_custom_call.1} parent=27 // pred_check
          %p628 = pneg %p109
        $region46: #{tpu_custom_call.1} parent=27 // pred_check_branch
          %630 = sbr.rel (%p628) target = $region48
        $region47: #{tpu_custom_call.1} parent=27 // pred_region
          %s632 = ssub.s32 16, 16
          %633 = vsyncadd %s625, %s632
          %s634 = smul.addr %s21, 16
          %s635 = scalar_lea.hbm %s2, %s634
          %s637 = sshll.u32 %s627, 4
          %s638 = int_to_ptr.vmem [resolvable:$true] %s637
          %640 = dma.vmem_to_hbm [thread:$0]  %s638, 16, %s635, %s625
        $region48: #{tpu_custom_call.1} parent=27 // pred_fallthru
          _
      $region28: #{tpu_custom_call.1} parent=5 // pred_fallthru
        _
      %p641 = scmp.le.s32.totalorder 2, %s11
      // Predicated region
      $region49: #{tpu_custom_call.1} parent=5 // pred_check
        %p642 = pneg %p641
      $region50: #{tpu_custom_call.1} parent=5 // pred_check_branch
        %644 = sbr.rel (%p642) target = $region52
      $region51: #{tpu_custom_call.1} parent=5 // pred_region
        %s645 = ssub.s32 %s11, 2
        // Predicated region
        $region53: #{tpu_custom_call.1} parent=51 // pred_check
          %p646 = pneg %p115
        $region54: #{tpu_custom_call.1} parent=51 // pred_check_branch
          %648 = sbr.rel (%p646) target = $region56
        $region55: #{tpu_custom_call.1} parent=51 // pred_region
          %s649 = sand.u32 %s100, 1
          %s650 = scalar_lea.sflag [#allocation5], %s649
          %s651 = sand.u32 %s100, 1
          %s652 = scalar_lea.vmem [#allocation4], %s651
          %653 = dma.done %s650, 16
        $region56: #{tpu_custom_call.1} parent=51 // pred_fallthru
          _
      $region52: #{tpu_custom_call.1} parent=5 // pred_fallthru
        _
    $region6: #{tpu_custom_call.1} parent=1 // loop_footer
      %s15 = sadd.s32 1, %s11
    $region7: #{tpu_custom_call.1} parent=1 // loop_footer_branch
      %10 = sbr.rel target = $region3
    $region8: #{tpu_custom_call.1} parent=1 // loop_exit
      _
    %654 = vsyncpa [#allocation5], 1
    %s655 = scalar_lea.sflag [#allocation5], 1
    %656 = vsyncpa %s655, 1

</llo_original>
